<compile_context>
chip_gen: v6e
topology: v6e:2x2x1
jax: 0.10.0
libtpu: 0.0.40
codegen_flags: <defaults>
</compile_context>

<pallas_src>
import functools

import jax
import jax.numpy as jnp
from jax.experimental import pallas as pl
from jax.experimental.pallas import tpu as pltpu


def _round_up(x, m):
    return ((x + m - 1) // m) * m


# ----------------------------- parameter setup ------------------------------
def compute_default_rope_parameters(head_dim: int, rope_theta: float,
                                    partial_rotary_factor: float = 1.0):
    """Mirror of compute_default_rope_parameters (dim = head_dim * partial_rotary_factor)."""
    dim = int(head_dim * partial_rotary_factor)
    inv_freq = 1.0 / (rope_theta ** (jnp.arange(0, dim, 2, dtype=jnp.float32) / dim))
    attention_factor = 1.0
    return inv_freq, attention_factor


# TODO(synk): llama3 rope-scaling variant (compute_llama3_parameters) only changes the
# inv_freq precompute above (plain JAX glue); the kernel below is agnostic to it.


# -------------------------------- kernel ------------------------------------
def _rope_kernel(pos_ref, inv_freq_ref, *refs, attention_scaling, head_dim,
                 heads_per_target):
    # pos_ref:      (tile_t, 1)            float32  token positions
    # inv_freq_ref: (1, head_dim // 2)     float32
    # refs:         n x_ref (tile_t, H_i*head_dim) followed by n o_ref (same shapes)
    n = len(heads_per_target)
    x_refs = refs[:n]
    o_refs = refs[n:]
    half = head_dim // 2

    pos = pos_ref[...]                               # (tile_t, 1)
    inv_freq = inv_freq_ref[...]                     # (1, half)
    freqs = pos * inv_freq                           # (tile_t, half)  outer product
    cos_f32 = jnp.cos(freqs) * attention_scaling     # half-width only (both emb halves equal)
    sin_f32 = jnp.sin(freqs) * attention_scaling

    for x_ref, o_ref, num_heads in zip(x_refs, o_refs, heads_per_target):
        x = x_ref[...]                               # (tile_t, H*head_dim)
        # Match the module: cos/sin are cast once to the target dtype, FMAs run in it.
        cos = cos_f32.astype(x.dtype)
        sin = sin_f32.astype(x.dtype)
        pieces = []
        for h in range(num_heads):                   # static unroll over heads
            base = h * head_dim
            x1 = x[:, base:base + half]
            x2 = x[:, base + half:base + head_dim]
            pieces.append(x1 * cos - x2 * sin)       # rotate-half, first half
            pieces.append(x2 * cos + x1 * sin)       # rotate-half, second half
        # Single full-width (lane-dense) assembly + store per target.
        o_ref[...] = jnp.concatenate(pieces, axis=-1).astype(o_ref.dtype)


# -------------------------------- wrapper ------------------------------------
def rotary_embedding_forward(position_ids, targets, *, head_dim, rope_theta,
                             attention_scaling=1.0, partial_rotary_factor=1.0,
                             tile_t=256, vmem_limit_bytes=48 * 1024 * 1024):
    """position_ids: [bsz, seq] int; targets: list of [bsz, seq, H_i*head_dim]."""
    inv_freq, _ = compute_default_rope_parameters(head_dim, rope_theta,
                                                  partial_rotary_factor)
    half = inv_freq.shape[0]
    rot_dim = 2 * half
    # TODO(synk): partial_rotary_factor < 1 (rot_dim < head_dim) pass-through tail is
    # not implemented in-kernel; guard against silently rotating it.
    assert rot_dim == head_dim, "kernel currently requires rotary_dim == head_dim"

    bsz, seq = position_ids.shape
    T = bsz * seq

    # Pick a large token tile (amortizes ~600-cycle/step pipeline overhead) but never
    # larger than the (8-row padded) token count; pad the tail instead of asserting.
    tile = min(tile_t, _round_up(T, 8))
    T_pad = _round_up(T, tile)
    pad_rows = T_pad - T

    pos = position_ids.reshape(T).astype(jnp.float32)
    if pad_rows:
        pos = jnp.pad(pos, (0, pad_rows))
    pos = pos.reshape(T_pad, 1)
    inv_freq_2d = inv_freq.reshape(1, half).astype(jnp.float32)

    xs, heads, hiddens = [], [], []
    for tgt in targets:
        hidden = tgt.shape[-1]
        H = hidden // head_dim
        x = tgt.reshape(T, hidden)                   # lane-dense 2-D layout
        if pad_rows:
            x = jnp.pad(x, ((0, pad_rows), (0, 0)))
        xs.append(x)
        heads.append(H)
        hiddens.append(hidden)

    kernel = functools.partial(
        _rope_kernel,
        attention_scaling=attention_scaling,
        head_dim=head_dim,
        heads_per_target=tuple(heads),
    )

    in_specs = [
        pl.BlockSpec((tile, 1), lambda i: (i, 0)),       # positions
        pl.BlockSpec((1, half), lambda i: (0, 0)),       # inv_freq (resident)
    ]
    out_specs = []
    out_shapes = []
    for x, hidden in zip(xs, hiddens):
        in_specs.append(pl.BlockSpec((tile, hidden), lambda i: (i, 0)))
        out_specs.append(pl.BlockSpec((tile, hidden), lambda i: (i, 0)))
        out_shapes.append(jax.ShapeDtypeStruct((T_pad, hidden), x.dtype))

    outs = pl.pallas_call(
        kernel,
        out_shape=tuple(out_shapes),
        grid_spec=pltpu.PrefetchScalarGridSpec(
            num_scalar_prefetch=0,
            grid=(T_pad // tile,),
            in_specs=in_specs,
            out_specs=tuple(out_specs),
        ),
        compiler_params=pltpu.CompilerParams(
            dimension_semantics=("parallel",),           # rows independent -> v7x 2-TC
            vmem_limit_bytes=vmem_limit_bytes,
        ),
    )(pos, inv_freq_2d, *xs)

    results = []
    for out, hidden in zip(outs, hiddens):
        results.append(out[:T].reshape(bsz, seq, hidden))
    return results


# ----------------------------- pure-JAX reference ----------------------------
def _reference(position_ids, targets, *, head_dim, rope_theta, attention_scaling=1.0):
    inv_freq, _ = compute_default_rope_parameters(head_dim, rope_theta)
    bsz, seq = position_ids.shape
    freqs = position_ids.astype(jnp.float32)[:, :, None] * inv_freq[None, None, :]
    emb = jnp.concatenate([freqs, freqs], axis=-1)                    # [B, S, D]
    cos = jnp.cos(emb) * attention_scaling
    sin = jnp.sin(emb) * attention_scaling
    outs = []
    for tgt in targets:
        H = tgt.shape[-1] // head_dim
        x = tgt.reshape(bsz, seq, H, head_dim).transpose(0, 2, 1, 3)  # [B, H, S, D]
        cos_b = cos[:, None, :, :].astype(x.dtype)
        sin_b = sin[:, None, :, :].astype(x.dtype)
        x1, x2 = x[..., :head_dim // 2], x[..., head_dim // 2:]
        rot = jnp.concatenate([-x2, x1], axis=-1)
        y = x * cos_b + rot * sin_b
        outs.append(y.transpose(0, 2, 1, 3).reshape(bsz, seq, H * head_dim))
    return outs


# ---------------------------------- main --------------------------------------
if __name__ == "__main__":
    bsz, seq = 2, 8
    num_heads, head_dim = 4, 32
    hidden = num_heads * head_dim
    rope_theta = 10000.0

    key = jax.random.PRNGKey(0)
    kq, kk = jax.random.split(key)
    q = jax.random.normal(kq, (bsz, seq, hidden), dtype=jnp.float32)
    k = jax.random.normal(kk, (bsz, seq, hidden), dtype=jnp.float32)
    position_ids = jnp.tile(jnp.arange(seq, dtype=jnp.int32)[None, :], (bsz, 1))

    q_out, k_out = rotary_embedding_forward(
        position_ids, [q, k], head_dim=head_dim, rope_theta=rope_theta)
    jax.block_until_ready(q_out)
    jax.block_until_ready(k_out)

    q_ref, k_ref = _reference(position_ids, [q, k],
                              head_dim=head_dim, rope_theta=rope_theta)
    assert jnp.allclose(q_out, q_ref, atol=1e-5, rtol=1e-5)
    assert jnp.allclose(k_out, k_ref, atol=1e-5, rtol=1e-5)

    print("KERNEL_OK")
</pallas_src>

<mosaic_0001>
module attributes {stable_mosaic.version = 11 : i64} {
  func.func @_rope_kernel(%arg0: i32, %arg1: memref<16x1xf32, #tpu.memory_space<vmem>>, %arg2: memref<1x16xf32, #tpu.memory_space<vmem>>, %arg3: memref<16x128xf32, #tpu.memory_space<vmem>>, %arg4: memref<16x128xf32, #tpu.memory_space<vmem>>, %arg5: memref<16x128xf32, #tpu.memory_space<vmem>>, %arg6: memref<16x128xf32, #tpu.memory_space<vmem>>) attributes {dimension_semantics = [#tpu.dimension_semantics<parallel>], iteration_bounds = array<i64: 1>, scalar_prefetch = 0 : i64, scratch_operands = 0 : i64, tpu.core_type = #tpu.core_type<tc>, window_params = [{transform_indices = @transform_0, window_bounds = array<i64: 16, 1>}, {pipeline_mode = #tpu.pipeline_mode<synchronous>, transform_indices = @transform_1, window_bounds = array<i64: 1, 16>}, {transform_indices = @transform_2, window_bounds = array<i64: 16, 128>}, {transform_indices = @transform_3, window_bounds = array<i64: 16, 128>}, {transform_indices = @transform_4, window_bounds = array<i64: 16, 128>}, {transform_indices = @transform_5, window_bounds = array<i64: 16, 128>}]} {
    %c0 = arith.constant 0 : index
    %c0_0 = arith.constant 0 : index
    %0 = vector.load %arg1[%c0, %c0_0] : memref<16x1xf32, #tpu.memory_space<vmem>>, vector<16x1xf32>
    %c0_1 = arith.constant 0 : index
    %c0_2 = arith.constant 0 : index
    %1 = vector.load %arg2[%c0_1, %c0_2] : memref<1x16xf32, #tpu.memory_space<vmem>>, vector<1x16xf32>
    %2 = vector.broadcast %0 : vector<16x1xf32> to vector<16x16xf32>
    %3 = vector.broadcast %1 : vector<1x16xf32> to vector<16x16xf32>
    %4 = arith.mulf %2, %3 : vector<16x16xf32>
    %5 = math.cos %4 : vector<16x16xf32>
    %cst = arith.constant 1.000000e+00 : f32
    %6 = vector.broadcast %cst : f32 to vector<16x16xf32>
    %7 = arith.mulf %5, %6 : vector<16x16xf32>
    %8 = math.sin %4 : vector<16x16xf32>
    %cst_3 = arith.constant 1.000000e+00 : f32
    %9 = vector.broadcast %cst_3 : f32 to vector<16x16xf32>
    %10 = arith.mulf %8, %9 : vector<16x16xf32>
    %c0_4 = arith.constant 0 : index
    %c0_5 = arith.constant 0 : index
    %11 = vector.load %arg3[%c0_4, %c0_5] : memref<16x128xf32, #tpu.memory_space<vmem>>, vector<16x128xf32>
    %12 = vector.extract_strided_slice %11 {offsets = [0, 0], sizes = [16, 16], strides = [1, 1]} : vector<16x128xf32> to vector<16x16xf32>
    %13 = vector.extract_strided_slice %11 {offsets = [0, 16], sizes = [16, 16], strides = [1, 1]} : vector<16x128xf32> to vector<16x16xf32>
    %14 = arith.mulf %12, %7 : vector<16x16xf32>
    %15 = arith.mulf %13, %10 : vector<16x16xf32>
    %16 = arith.subf %14, %15 : vector<16x16xf32>
    %17 = arith.mulf %13, %7 : vector<16x16xf32>
    %18 = arith.mulf %12, %10 : vector<16x16xf32>
    %19 = arith.addf %17, %18 : vector<16x16xf32>
    %20 = vector.extract_strided_slice %11 {offsets = [0, 32], sizes = [16, 16], strides = [1, 1]} : vector<16x128xf32> to vector<16x16xf32>
    %21 = vector.extract_strided_slice %11 {offsets = [0, 48], sizes = [16, 16], strides = [1, 1]} : vector<16x128xf32> to vector<16x16xf32>
    %22 = arith.mulf %20, %7 : vector<16x16xf32>
    %23 = arith.mulf %21, %10 : vector<16x16xf32>
    %24 = arith.subf %22, %23 : vector<16x16xf32>
    %25 = arith.mulf %21, %7 : vector<16x16xf32>
    %26 = arith.mulf %20, %10 : vector<16x16xf32>
    %27 = arith.addf %25, %26 : vector<16x16xf32>
    %28 = vector.extract_strided_slice %11 {offsets = [0, 64], sizes = [16, 16], strides = [1, 1]} : vector<16x128xf32> to vector<16x16xf32>
    %29 = vector.extract_strided_slice %11 {offsets = [0, 80], sizes = [16, 16], strides = [1, 1]} : vector<16x128xf32> to vector<16x16xf32>
    %30 = arith.mulf %28, %7 : vector<16x16xf32>
    %31 = arith.mulf %29, %10 : vector<16x16xf32>
    %32 = arith.subf %30, %31 : vector<16x16xf32>
    %33 = arith.mulf %29, %7 : vector<16x16xf32>
    %34 = arith.mulf %28, %10 : vector<16x16xf32>
    %35 = arith.addf %33, %34 : vector<16x16xf32>
    %36 = vector.extract_strided_slice %11 {offsets = [0, 96], sizes = [16, 16], strides = [1, 1]} : vector<16x128xf32> to vector<16x16xf32>
    %37 = vector.extract_strided_slice %11 {offsets = [0, 112], sizes = [16, 16], strides = [1, 1]} : vector<16x128xf32> to vector<16x16xf32>
    %38 = arith.mulf %36, %7 : vector<16x16xf32>
    %39 = arith.mulf %37, %10 : vector<16x16xf32>
    %40 = arith.subf %38, %39 : vector<16x16xf32>
    %41 = arith.mulf %37, %7 : vector<16x16xf32>
    %42 = arith.mulf %36, %10 : vector<16x16xf32>
    %43 = arith.addf %41, %42 : vector<16x16xf32>
    %44 = tpu.concatenate %16, %19, %24, %27, %32, %35, %40, %43 in 1 : vector<16x16xf32>, vector<16x16xf32>, vector<16x16xf32>, vector<16x16xf32>, vector<16x16xf32>, vector<16x16xf32>, vector<16x16xf32>, vector<16x16xf32> -> vector<16x128xf32>
    %c0_6 = arith.constant 0 : index
    %c0_7 = arith.constant 0 : index
    %45 = vector.load %arg5[%c0_6, %c0_7] : memref<16x128xf32, #tpu.memory_space<vmem>>, vector<16x128xf32>
    tpu.vector_store %arg5[%c0_6, %c0_7], %44 {strides = array<i32>} : memref<16x128xf32, #tpu.memory_space<vmem>>, vector<16x128xf32>,
    %c0_8 = arith.constant 0 : index
    %c0_9 = arith.constant 0 : index
    %46 = vector.load %arg4[%c0_8, %c0_9] : memref<16x128xf32, #tpu.memory_space<vmem>>, vector<16x128xf32>
    %47 = vector.extract_strided_slice %46 {offsets = [0, 0], sizes = [16, 16], strides = [1, 1]} : vector<16x128xf32> to vector<16x16xf32>
    %48 = vector.extract_strided_slice %46 {offsets = [0, 16], sizes = [16, 16], strides = [1, 1]} : vector<16x128xf32> to vector<16x16xf32>
    %49 = arith.mulf %47, %7 : vector<16x16xf32>
    %50 = arith.mulf %48, %10 : vector<16x16xf32>
    %51 = arith.subf %49, %50 : vector<16x16xf32>
    %52 = arith.mulf %48, %7 : vector<16x16xf32>
    %53 = arith.mulf %47, %10 : vector<16x16xf32>
    %54 = arith.addf %52, %53 : vector<16x16xf32>
    %55 = vector.extract_strided_slice %46 {offsets = [0, 32], sizes = [16, 16], strides = [1, 1]} : vector<16x128xf32> to vector<16x16xf32>
    %56 = vector.extract_strided_slice %46 {offsets = [0, 48], sizes = [16, 16], strides = [1, 1]} : vector<16x128xf32> to vector<16x16xf32>
    %57 = arith.mulf %55, %7 : vector<16x16xf32>
    %58 = arith.mulf %56, %10 : vector<16x16xf32>
    %59 = arith.subf %57, %58 : vector<16x16xf32>
    %60 = arith.mulf %56, %7 : vector<16x16xf32>
    %61 = arith.mulf %55, %10 : vector<16x16xf32>
    %62 = arith.addf %60, %61 : vector<16x16xf32>
    %63 = vector.extract_strided_slice %46 {offsets = [0, 64], sizes = [16, 16], strides = [1, 1]} : vector<16x128xf32> to vector<16x16xf32>
    %64 = vector.extract_strided_slice %46 {offsets = [0, 80], sizes = [16, 16], strides = [1, 1]} : vector<16x128xf32> to vector<16x16xf32>
    %65 = arith.mulf %63, %7 : vector<16x16xf32>
    %66 = arith.mulf %64, %10 : vector<16x16xf32>
    %67 = arith.subf %65, %66 : vector<16x16xf32>
    %68 = arith.mulf %64, %7 : vector<16x16xf32>
    %69 = arith.mulf %63, %10 : vector<16x16xf32>
    %70 = arith.addf %68, %69 : vector<16x16xf32>
    %71 = vector.extract_strided_slice %46 {offsets = [0, 96], sizes = [16, 16], strides = [1, 1]} : vector<16x128xf32> to vector<16x16xf32>
    %72 = vector.extract_strided_slice %46 {offsets = [0, 112], sizes = [16, 16], strides = [1, 1]} : vector<16x128xf32> to vector<16x16xf32>
    %73 = arith.mulf %71, %7 : vector<16x16xf32>
    %74 = arith.mulf %72, %10 : vector<16x16xf32>
    %75 = arith.subf %73, %74 : vector<16x16xf32>
    %76 = arith.mulf %72, %7 : vector<16x16xf32>
    %77 = arith.mulf %71, %10 : vector<16x16xf32>
    %78 = arith.addf %76, %77 : vector<16x16xf32>
    %79 = tpu.concatenate %51, %54, %59, %62, %67, %70, %75, %78 in 1 : vector<16x16xf32>, vector<16x16xf32>, vector<16x16xf32>, vector<16x16xf32>, vector<16x16xf32>, vector<16x16xf32>, vector<16x16xf32>, vector<16x16xf32> -> vector<16x128xf32>
    %c0_10 = arith.constant 0 : index
    %c0_11 = arith.constant 0 : index
    %80 = vector.load %arg6[%c0_10, %c0_11] : memref<16x128xf32, #tpu.memory_space<vmem>>, vector<16x128xf32>
    tpu.vector_store %arg6[%c0_10, %c0_11], %79 {strides = array<i32>} : memref<16x128xf32, #tpu.memory_space<vmem>>, vector<16x128xf32>,
    return
  }
  func.func @transform_0(%arg0: i32) -> (i32, i32) {
    %c0_i32 = arith.constant 0 : i32
    %c0_i32_0 = arith.constant 0 : i32
    return %arg0, %c0_i32 : i32, i32
  }
  func.func @transform_1(%arg0: i32) -> (i32, i32) {
    %c0_i32 = arith.constant 0 : i32
    %c0_i32_0 = arith.constant 0 : i32
    %c0_i32_1 = arith.constant 0 : i32
    return %c0_i32, %c0_i32_0 : i32, i32
  }
  func.func @transform_2(%arg0: i32) -> (i32, i32) {
    %c0_i32 = arith.constant 0 : i32
    %c0_i32_0 = arith.constant 0 : i32
    return %arg0, %c0_i32 : i32, i32
  }
  func.func @transform_3(%arg0: i32) -> (i32, i32) {
    %c0_i32 = arith.constant 0 : i32
    %c0_i32_0 = arith.constant 0 : i32
    return %arg0, %c0_i32 : i32, i32
  }
  func.func @transform_4(%arg0: i32) -> (i32, i32) {
    %c0_i32 = arith.constant 0 : i32
    %c0_i32_0 = arith.constant 0 : i32
    return %arg0, %c0_i32 : i32, i32
  }
  func.func @transform_5(%arg0: i32) -> (i32, i32) {
    %c0_i32 = arith.constant 0 : i32
    %c0_i32_0 = arith.constant 0 : i32
    return %arg0, %c0_i32 : i32, i32
  }
}

</mosaic_0001>

<llo_original>
// kernel: tpu_custom_call.1
$region0: #{tpu_custom_call.1}
  #allocation0 [shape = 'u32[]', space=smem, size = 0x4, offset = 0x4, fixed_abs, tag = 'smem constant byte address 0x4 - core index']
  #allocation1 [shape = 'u32[144,128]{1,0:T(1,128)}', space=vmem, size = 0x12000, scoped, tag = 'internal scratch']
  %s0 = inlined_call_operand.vmem [shape: f32[16,1], index: 0, kind: input, shape index: {}]
  %s1 = inlined_call_operand.vmem [shape: f32[1,16], index: 1, kind: input, shape index: {}]
  %s2 = inlined_call_operand.vmem [shape: f32[16,128], index: 2, kind: input, shape index: {}]
  %s3 = inlined_call_operand.hbm [shape: f32[16,128], index: 3, kind: input, shape index: {}]
  %s4 = inlined_call_operand.hbm [shape: f32[16,128], index: 4, kind: output, shape index: {0}]
  %s5 = inlined_call_operand.hbm [shape: f32[16,128], index: 5, kind: output, shape index: {1}]
  %6 = xla_tuple %s4, %s5
  %s7 = sld [smem:[#allocation0]]
  $region38: #{tpu_custom_call.1} parent=0
    _
  %s9 = ssub.s32 1, %s7
  %s10 = scalar_select 0, %s9, %s7
  $region1: #{tpu_custom_call.1} parent=0
    #allocation2 [shape = 'u8[8192]{0}', space=vmem, size = 0x2000, scoped, tag = 'input window, operand 3, single buffered']
    #allocation3 [shape = 's32[1]{0}', space=sflag, size = 0x4, scoped, tag = 'scoped memory for tpu_custom_call.1']
    #allocation4 [shape = 's32[1]{0}', space=sflag, size = 0x4, scoped, tag = 'scoped memory for tpu_custom_call.1']
    #allocation5 [shape = 'u8[8192]{0}', space=vmem, size = 0x2000, scoped, tag = 'output window, operand 0, single buffered']
    #allocation6 [shape = 'u8[8192]{0}', space=vmem, size = 0x2000, scoped, tag = 'output window, operand 1, single buffered']
    #allocation7 [shape = 's32[1]{0}', space=sflag, size = 0x4, scoped, tag = 'scoped memory for tpu_custom_call.1']
    %11 = vsyncpa [#allocation3], 0
    %12 = vsyncpa [#allocation4], 0
    %13 = vsyncpa [#allocation7], 0
    // Predicated region
    $region2: #{tpu_custom_call.1} parent=1 // pred_check
      _
    $region3: #{tpu_custom_call.1} parent=1 // pred_check_branch
      %15 = sbr.rel (0) target = $region5
    $region4: #{tpu_custom_call.1} parent=1 // pred_region
      _
    $region5: #{tpu_custom_call.1} parent=1 // pred_fallthru
      _
    // Predicated region
    $region6: #{tpu_custom_call.1} parent=1 // pred_check
      _
    $region7: #{tpu_custom_call.1} parent=1 // pred_check_branch
      %17 = sbr.rel (0) target = $region9
    $region8: #{tpu_custom_call.1} parent=1 // pred_region
      _
    $region9: #{tpu_custom_call.1} parent=1 // pred_fallthru
      _
    // Predicated region
    $region10: #{tpu_custom_call.1} parent=1 // pred_check
      _
    $region11: #{tpu_custom_call.1} parent=1 // pred_check_branch
      %19 = sbr.rel (0) target = $region13
    $region12: #{tpu_custom_call.1} parent=1 // pred_region
      _
    $region13: #{tpu_custom_call.1} parent=1 // pred_fallthru
      _
    // Predicated region
    $region14: #{tpu_custom_call.1} parent=1 // pred_check
      _
    $region15: #{tpu_custom_call.1} parent=1 // pred_check_branch
      %21 = sbr.rel (0) target = $region17
    $region16: #{tpu_custom_call.1} parent=1 // pred_region
      %s23 = ssub.s32 256, 256
      %24 = vsyncadd [#allocation3], %s23
      %s25 = sshll.u32 [#allocation2], 4
      %s26 = int_to_ptr.vmem [resolvable:$true] %s25
      %31 = dma.hbm_to_vmem [thread:$0]  %s3, 256, %s26, [#allocation3], 128, 128, 8
    $region17: #{tpu_custom_call.1} parent=1 // pred_fallthru
      _
    // Predicated region
    $region18: #{tpu_custom_call.1} parent=1 // pred_check
      _
    $region19: #{tpu_custom_call.1} parent=1 // pred_check_branch
      %33 = sbr.rel (0) target = $region21
    $region20: #{tpu_custom_call.1} parent=1 // pred_region
      %34 = dma.done [#allocation3], 256
    $region21: #{tpu_custom_call.1} parent=1 // pred_fallthru
      _
    %v35 = vld [vmem:[%s0] sm:$0xff]
    %v36 = vld [vmem:[%s0 + $0x8] sm:$0xff]
    %v37 = vld [vmem:[%s1] sm:$0x1]
    %39 = vset.pattern.permute.xlu0 0
    %40 = vperm.xlu0 %39, %v35
    %v41 = vpop.permute.xlu0 %40
    %44 = vset.pattern.permute.xlu0 0
    %45 = vperm.xlu0 %44, %v36
    %v46 = vpop.permute.xlu0 %45
    %v49 = vlaneseq
    %v50 = vshrl.u32 %v49, 7
    %v51 = vsub.s32 0, %v50
    %v52 = vrot.slane %v37, %v51
    %v54 = vmul.f32 %v41, %v52
    %v55 = vmul.f32 %v46, %v52
    %v56 = vand.u32 2147483647, %v54
    %vm57 = vcmp.le.f32.partialorder %v56, 0.7853982
    %vm58 = vcmp.lt.s32.totalorder %v54, 0
    %v59 = vand.u32 %v54, 2139095040
    %v60 = vshrl.u32 %v59, 23
    %v61 = vsub.s32 %v60, 127
    %v62 = vand.u32 2147483647, %v54
    %v63 = vand.u32 %v62, 8388607
    %v64 = vor.u32 %v63, 8388608
    %v65 = vsub.s32 0, %v64
    %v66 = vadd.s32 %v61, 1
    %vm67 = vcmp.gt.s32.totalorder %v66, 0
    %v68 = vsel %vm67, %v66, 0
    %v69 = vshrl.u32 %v68, 5
    %v70 = vand.u32 %v68, 31
    %v71 = vsub.s32 32, %v70
    %v72 = vshrl.u32 683565275, %v71
    %v73 = vshll.u32 683565275, %v70
    %v74 = vshrl.u32 2475754826, %v71
    %v75 = vor.u32 %v73, %v74
    %v76 = vshll.u32 2475754826, %v70
    %v77 = vshrl.u32 2131351028, %v71
    %v78 = vor.u32 %v76, %v77
    %v79 = vshll.u32 2131351028, %v70
    %v80 = vshrl.u32 2102212464, %v71
    %v81 = vor.u32 %v79, %v80
    %v82 = vshll.u32 2102212464, %v70
    %v83 = vshrl.u32 920167782, %v71
    %v84 = vor.u32 %v82, %v83
    %v85 = vshll.u32 920167782, %v70
    %v86 = vshrl.u32 1326507024, %v71
    %v87 = vor.u32 %v85, %v86
    %vm88 = vcmp.lt.s32.totalorder %v69, 1
    %vm89 = vcmp.lt.s32.totalorder %v69, 2
    %vm90 = vcmp.lt.s32.totalorder %v69, 3
    %vm91 = vcmp.lt.s32.totalorder %v69, 4
    %v92 = vsel %vm88, %v72, %v75
    %v93 = vsel %vm91, %v81, 2102212464
    %v94 = vsel %vm90, %v78, %v93
    %v95 = vsel %vm89, %v92, %v94
    %v96 = vsel %vm88, %v75, %v78
    %v97 = vsel %vm91, %v84, 920167782
    %v98 = vsel %vm90, %v81, %v97
    %v99 = vsel %vm89, %v96, %v98
    %v100 = vsel %vm88, %v78, %v81
    %v101 = vsel %vm91, %v87, 1326507024
    %v102 = vsel %vm90, %v84, %v101
    %v103 = vsel %vm89, %v100, %v102
    %v104 = vshll.u32 %v64, 8
    %v105 = vmul.u32.u64.compose %v104, %v103
    %v106 = vextract.low.u32 %v105
    %v107 = vextract.high.u32 %v105
    %v108 = vmul.u32.u64.compose %v104, %v99
    %v109 = vextract.low.u32 %v108
    %v110 = vextract.high.u32 %v108
    %v111 = vmul.u32 %v104, %v95
    %v112 = vadd.s32 %v107, %v109
    %vm113 = vc.u32 %v107, %v109
    %v114 = vadd.s32 %v110, 1
    %v115 = vsel %vm113, %v114, %v110
    %v116 = vadd.s32 %v111, %v115
    %v117 = vadd.s32 %v116, 536870912
    %v118 = vshrl.u32 %v117, 30
    %v119 = vshll.u32 %v118, 30
    %v120 = vsub.s32 %v116, %v119
    %vm121 = vcmp.lt.s32.totalorder %v120, 0
    %v122 = vsub.s32 0, %v120
    %v123 = vsel %vm121, %v122, %v120
    %v124 = vclz %v123
    %v125 = vsub.s32 %v124, 2
    %vm126 = vcmp.gt.s32.totalorder 0, %v125
    %v127 = vsel %vm126, 0, %v125
    %v128 = vsub.s32 32, %v127
    %v129 = vshll.u32 %v120, %v127
    %v130 = vshrl.u32 %v112, %v128
    %v131 = vor.u32 %v129, %v130
    %v132 = vsub.s32 4294967266, %v127
    %v133 = vadd.s32 %v132, 127
    %v134 = vshll.u32 %v133, 23
    %v135 = vor.u32 4788187, %v134
    %v136 = vand.u32 2147483647, %v135
    %v138 = vcvt.s32.f32 %v131
    %v139 = vmul.f32 %v138, %v136
    %v140 = vxor.u32 %v139, 2147483648
    %v141 = vsel %vm58, %v140, %v139
    %v142 = vsub.s32 4, %v118
    %v143 = vsel %vm58, %v142, %v118
    %v144 = vsel %vm57, %v54, %v141
    %v145 = vsel %vm57, 0, %v143
    %v146 = vcosq.f32.pop %v144
    %v147 = vsinq.f32.pop %v144
    %vm148 = vweird.f32 %v54
    %v149 = vand.u32 %v145, 3
    %vm150 = vcmp.lt.s32.totalorder %v149, 2
    %vm151 = vcmp.eq.s32.totalorder %v149, 0
    %v152 = vxor.u32 %v147, 2147483648
    %v153 = vsel %vm151, %v146, %v152
    %vm154 = vcmp.eq.s32.totalorder %v149, 2
    %v155 = vxor.u32 %v146, 2147483648
    %v156 = vsel %vm154, %v155, %v147
    %v157 = vsel %vm150, %v153, %v156
    %v158 = vsel %vm148, nan, %v157
    %v159 = vand.u32 2147483647, %v55
    %vm160 = vcmp.le.f32.partialorder %v159, 0.7853982
    %vm161 = vcmp.lt.s32.totalorder %v55, 0
    %v162 = vand.u32 %v55, 2139095040
    %v163 = vshrl.u32 %v162, 23
    %v164 = vsub.s32 %v163, 127
    %v165 = vand.u32 2147483647, %v55
    %v166 = vand.u32 %v165, 8388607
    %v167 = vor.u32 %v166, 8388608
    %v168 = vsub.s32 0, %v167
    %v169 = vadd.s32 %v164, 1
    %vm170 = vcmp.gt.s32.totalorder %v169, 0
    %v171 = vsel %vm170, %v169, 0
    %v172 = vshrl.u32 %v171, 5
    %v173 = vand.u32 %v171, 31
    %v174 = vsub.s32 32, %v173
    %v175 = vshrl.u32 683565275, %v174
    %v176 = vshll.u32 683565275, %v173
    %v177 = vshrl.u32 2475754826, %v174
    %v178 = vor.u32 %v176, %v177
    %v179 = vshll.u32 2475754826, %v173
    %v180 = vshrl.u32 2131351028, %v174
    %v181 = vor.u32 %v179, %v180
    %v182 = vshll.u32 2131351028, %v173
    %v183 = vshrl.u32 2102212464, %v174
    %v184 = vor.u32 %v182, %v183
    %v185 = vshll.u32 2102212464, %v173
    %v186 = vshrl.u32 920167782, %v174
    %v187 = vor.u32 %v185, %v186
    %v188 = vshll.u32 920167782, %v173
    %v189 = vshrl.u32 1326507024, %v174
    %v190 = vor.u32 %v188, %v189
    %vm191 = vcmp.lt.s32.totalorder %v172, 1
    %vm192 = vcmp.lt.s32.totalorder %v172, 2
    %vm193 = vcmp.lt.s32.totalorder %v172, 3
    %vm194 = vcmp.lt.s32.totalorder %v172, 4
    %v195 = vsel %vm191, %v175, %v178
    %v196 = vsel %vm194, %v184, 2102212464
    %v197 = vsel %vm193, %v181, %v196
    %v198 = vsel %vm192, %v195, %v197
    %v199 = vsel %vm191, %v178, %v181
    %v200 = vsel %vm194, %v187, 920167782
    %v201 = vsel %vm193, %v184, %v200
    %v202 = vsel %vm192, %v199, %v201
    %v203 = vsel %vm191, %v181, %v184
    %v204 = vsel %vm194, %v190, 1326507024
    %v205 = vsel %vm193, %v187, %v204
    %v206 = vsel %vm192, %v203, %v205
    %v207 = vshll.u32 %v167, 8
    %v208 = vmul.u32.u64.compose %v207, %v206
    %v209 = vextract.low.u32 %v208
    %v210 = vextract.high.u32 %v208
    %v211 = vmul.u32.u64.compose %v207, %v202
    %v212 = vextract.low.u32 %v211
    %v213 = vextract.high.u32 %v211
    %v214 = vmul.u32 %v207, %v198
    %v215 = vadd.s32 %v210, %v212
    %vm216 = vc.u32 %v210, %v212
    %v217 = vadd.s32 %v213, 1
    %v218 = vsel %vm216, %v217, %v213
    %v219 = vadd.s32 %v214, %v218
    %v220 = vadd.s32 %v219, 536870912
    %v221 = vshrl.u32 %v220, 30
    %v222 = vshll.u32 %v221, 30
    %v223 = vsub.s32 %v219, %v222
    %vm224 = vcmp.lt.s32.totalorder %v223, 0
    %v225 = vsub.s32 0, %v223
    %v226 = vsel %vm224, %v225, %v223
    %v227 = vclz %v226
    %v228 = vsub.s32 %v227, 2
    %vm229 = vcmp.gt.s32.totalorder 0, %v228
    %v230 = vsel %vm229, 0, %v228
    %v231 = vsub.s32 32, %v230
    %v232 = vshll.u32 %v223, %v230
    %v233 = vshrl.u32 %v215, %v231
    %v234 = vor.u32 %v232, %v233
    %v235 = vsub.s32 4294967266, %v230
    %v236 = vadd.s32 %v235, 127
    %v237 = vshll.u32 %v236, 23
    %v238 = vor.u32 4788187, %v237
    %v239 = vand.u32 2147483647, %v238
    %v241 = vcvt.s32.f32 %v234
    %v242 = vmul.f32 %v241, %v239
    %v243 = vxor.u32 %v242, 2147483648
    %v244 = vsel %vm161, %v243, %v242
    %v245 = vsub.s32 4, %v221
    %v246 = vsel %vm161, %v245, %v221
    %v247 = vsel %vm160, %v55, %v244
    %v248 = vsel %vm160, 0, %v246
    %v249 = vcosq.f32.pop %v247
    %v250 = vsinq.f32.pop %v247
    %vm251 = vweird.f32 %v55
    %v252 = vand.u32 %v248, 3
    %vm253 = vcmp.lt.s32.totalorder %v252, 2
    %vm254 = vcmp.eq.s32.totalorder %v252, 0
    %v255 = vxor.u32 %v250, 2147483648
    %v256 = vsel %vm254, %v249, %v255
    %vm257 = vcmp.eq.s32.totalorder %v252, 2
    %v258 = vxor.u32 %v249, 2147483648
    %v259 = vsel %vm257, %v258, %v250
    %v260 = vsel %vm253, %v256, %v259
    %v261 = vsel %vm251, nan, %v260
    %v262 = vand.u32 2147483647, %v54
    %vm263 = vcmp.le.f32.partialorder %v262, 0.7853982
    %vm264 = vcmp.lt.s32.totalorder %v54, 0
    %v265 = vand.u32 %v54, 2139095040
    %v266 = vshrl.u32 %v265, 23
    %v267 = vsub.s32 %v266, 127
    %v268 = vand.u32 2147483647, %v54
    %v269 = vand.u32 %v268, 8388607
    %v270 = vor.u32 %v269, 8388608
    %v271 = vsub.s32 0, %v270
    %v272 = vadd.s32 %v267, 1
    %vm273 = vcmp.gt.s32.totalorder %v272, 0
    %v274 = vsel %vm273, %v272, 0
    %v275 = vshrl.u32 %v274, 5
    %v276 = vand.u32 %v274, 31
    %v277 = vsub.s32 32, %v276
    %v278 = vshrl.u32 683565275, %v277
    %v279 = vshll.u32 683565275, %v276
    %v280 = vshrl.u32 2475754826, %v277
    %v281 = vor.u32 %v279, %v280
    %v282 = vshll.u32 2475754826, %v276
    %v283 = vshrl.u32 2131351028, %v277
    %v284 = vor.u32 %v282, %v283
    %v285 = vshll.u32 2131351028, %v276
    %v286 = vshrl.u32 2102212464, %v277
    %v287 = vor.u32 %v285, %v286
    %v288 = vshll.u32 2102212464, %v276
    %v289 = vshrl.u32 920167782, %v277
    %v290 = vor.u32 %v288, %v289
    %v291 = vshll.u32 920167782, %v276
    %v292 = vshrl.u32 1326507024, %v277
    %v293 = vor.u32 %v291, %v292
    %vm294 = vcmp.lt.s32.totalorder %v275, 1
    %vm295 = vcmp.lt.s32.totalorder %v275, 2
    %vm296 = vcmp.lt.s32.totalorder %v275, 3
    %vm297 = vcmp.lt.s32.totalorder %v275, 4
    %v298 = vsel %vm294, %v278, %v281
    %v299 = vsel %vm297, %v287, 2102212464
    %v300 = vsel %vm296, %v284, %v299
    %v301 = vsel %vm295, %v298, %v300
    %v302 = vsel %vm294, %v281, %v284
    %v303 = vsel %vm297, %v290, 920167782
    %v304 = vsel %vm296, %v287, %v303
    %v305 = vsel %vm295, %v302, %v304
    %v306 = vsel %vm294, %v284, %v287
    %v307 = vsel %vm297, %v293, 1326507024
    %v308 = vsel %vm296, %v290, %v307
    %v309 = vsel %vm295, %v306, %v308
    %v310 = vshll.u32 %v270, 8
    %v311 = vmul.u32.u64.compose %v310, %v309
    %v312 = vextract.low.u32 %v311
    %v313 = vextract.high.u32 %v311
    %v314 = vmul.u32.u64.compose %v310, %v305
    %v315 = vextract.low.u32 %v314
    %v316 = vextract.high.u32 %v314
    %v317 = vmul.u32 %v310, %v301
    %v318 = vadd.s32 %v313, %v315
    %vm319 = vc.u32 %v313, %v315
    %v320 = vadd.s32 %v316, 1
    %v321 = vsel %vm319, %v320, %v316
    %v322 = vadd.s32 %v317, %v321
    %v323 = vadd.s32 %v322, 536870912
    %v324 = vshrl.u32 %v323, 30
    %v325 = vshll.u32 %v324, 30
    %v326 = vsub.s32 %v322, %v325
    %vm327 = vcmp.lt.s32.totalorder %v326, 0
    %v328 = vsub.s32 0, %v326
    %v329 = vsel %vm327, %v328, %v326
    %v330 = vclz %v329
    %v331 = vsub.s32 %v330, 2
    %vm332 = vcmp.gt.s32.totalorder 0, %v331
    %v333 = vsel %vm332, 0, %v331
    %v334 = vsub.s32 32, %v333
    %v335 = vshll.u32 %v326, %v333
    %v336 = vshrl.u32 %v318, %v334
    %v337 = vor.u32 %v335, %v336
    %v338 = vsub.s32 4294967266, %v333
    %v339 = vadd.s32 %v338, 127
    %v340 = vshll.u32 %v339, 23
    %v341 = vor.u32 4788187, %v340
    %v342 = vand.u32 2147483647, %v341
    %v344 = vcvt.s32.f32 %v337
    %v345 = vmul.f32 %v344, %v342
    %v346 = vxor.u32 %v345, 2147483648
    %v347 = vsel %vm264, %v346, %v345
    %v348 = vsub.s32 4, %v324
    %v349 = vsel %vm264, %v348, %v324
    %v350 = vsel %vm263, %v54, %v347
    %v351 = vsel %vm263, 0, %v349
    %v352 = vcosq.f32.pop %v350
    %v353 = vsinq.f32.pop %v350
    %vm354 = vweird.f32 %v54
    %v355 = vadd.s32 %v351, 3
    %v356 = vand.u32 %v355, 3
    %vm357 = vcmp.lt.s32.totalorder %v356, 2
    %vm358 = vcmp.eq.s32.totalorder %v356, 0
    %v359 = vxor.u32 %v353, 2147483648
    %v360 = vsel %vm358, %v352, %v359
    %vm361 = vcmp.eq.s32.totalorder %v356, 2
    %v362 = vxor.u32 %v352, 2147483648
    %v363 = vsel %vm361, %v362, %v353
    %v364 = vsel %vm357, %v360, %v363
    %v365 = vsel %vm354, nan, %v364
    %v366 = vand.u32 2147483647, %v55
    %vm367 = vcmp.le.f32.partialorder %v366, 0.7853982
    %vm368 = vcmp.lt.s32.totalorder %v55, 0
    %v369 = vand.u32 %v55, 2139095040
    %v370 = vshrl.u32 %v369, 23
    %v371 = vsub.s32 %v370, 127
    %v372 = vand.u32 2147483647, %v55
    %v373 = vand.u32 %v372, 8388607
    %v374 = vor.u32 %v373, 8388608
    %v375 = vsub.s32 0, %v374
    %v376 = vadd.s32 %v371, 1
    %vm377 = vcmp.gt.s32.totalorder %v376, 0
    %v378 = vsel %vm377, %v376, 0
    %v379 = vshrl.u32 %v378, 5
    %v380 = vand.u32 %v378, 31
    %v381 = vsub.s32 32, %v380
    %v382 = vshrl.u32 683565275, %v381
    %v383 = vshll.u32 683565275, %v380
    %v384 = vshrl.u32 2475754826, %v381
    %v385 = vor.u32 %v383, %v384
    %v386 = vshll.u32 2475754826, %v380
    %v387 = vshrl.u32 2131351028, %v381
    %v388 = vor.u32 %v386, %v387
    %v389 = vshll.u32 2131351028, %v380
    %v390 = vshrl.u32 2102212464, %v381
    %v391 = vor.u32 %v389, %v390
    %v392 = vshll.u32 2102212464, %v380
    %v393 = vshrl.u32 920167782, %v381
    %v394 = vor.u32 %v392, %v393
    %v395 = vshll.u32 920167782, %v380
    %v396 = vshrl.u32 1326507024, %v381
    %v397 = vor.u32 %v395, %v396
    %vm398 = vcmp.lt.s32.totalorder %v379, 1
    %vm399 = vcmp.lt.s32.totalorder %v379, 2
    %vm400 = vcmp.lt.s32.totalorder %v379, 3
    %vm401 = vcmp.lt.s32.totalorder %v379, 4
    %v402 = vsel %vm398, %v382, %v385
    %v403 = vsel %vm401, %v391, 2102212464
    %v404 = vsel %vm400, %v388, %v403
    %v405 = vsel %vm399, %v402, %v404
    %v406 = vsel %vm398, %v385, %v388
    %v407 = vsel %vm401, %v394, 920167782
    %v408 = vsel %vm400, %v391, %v407
    %v409 = vsel %vm399, %v406, %v408
    %v410 = vsel %vm398, %v388, %v391
    %v411 = vsel %vm401, %v397, 1326507024
    %v412 = vsel %vm400, %v394, %v411
    %v413 = vsel %vm399, %v410, %v412
    %v414 = vshll.u32 %v374, 8
    %v415 = vmul.u32.u64.compose %v414, %v413
    %v416 = vextract.low.u32 %v415
    %v417 = vextract.high.u32 %v415
    %v418 = vmul.u32.u64.compose %v414, %v409
    %v419 = vextract.low.u32 %v418
    %v420 = vextract.high.u32 %v418
    %v421 = vmul.u32 %v414, %v405
    %v422 = vadd.s32 %v417, %v419
    %vm423 = vc.u32 %v417, %v419
    %v424 = vadd.s32 %v420, 1
    %v425 = vsel %vm423, %v424, %v420
    %v426 = vadd.s32 %v421, %v425
    %v427 = vadd.s32 %v426, 536870912
    %v428 = vshrl.u32 %v427, 30
    %v429 = vshll.u32 %v428, 30
    %v430 = vsub.s32 %v426, %v429
    %vm431 = vcmp.lt.s32.totalorder %v430, 0
    %v432 = vsub.s32 0, %v430
    %v433 = vsel %vm431, %v432, %v430
    %v434 = vclz %v433
    %v435 = vsub.s32 %v434, 2
    %vm436 = vcmp.gt.s32.totalorder 0, %v435
    %v437 = vsel %vm436, 0, %v435
    %v438 = vsub.s32 32, %v437
    %v439 = vshll.u32 %v430, %v437
    %v440 = vshrl.u32 %v422, %v438
    %v441 = vor.u32 %v439, %v440
    %v442 = vsub.s32 4294967266, %v437
    %v443 = vadd.s32 %v442, 127
    %v444 = vshll.u32 %v443, 23
    %v445 = vor.u32 4788187, %v444
    %v446 = vand.u32 2147483647, %v445
    %v448 = vcvt.s32.f32 %v441
    %v449 = vmul.f32 %v448, %v446
    %v450 = vxor.u32 %v449, 2147483648
    %v451 = vsel %vm368, %v450, %v449
    %v452 = vsub.s32 4, %v428
    %v453 = vsel %vm368, %v452, %v428
    %v454 = vsel %vm367, %v55, %v451
    %v455 = vsel %vm367, 0, %v453
    %v456 = vcosq.f32.pop %v454
    %v457 = vsinq.f32.pop %v454
    %vm458 = vweird.f32 %v55
    %v459 = vadd.s32 %v455, 3
    %v460 = vand.u32 %v459, 3
    %vm461 = vcmp.lt.s32.totalorder %v460, 2
    %vm462 = vcmp.eq.s32.totalorder %v460, 0
    %v463 = vxor.u32 %v457, 2147483648
    %v464 = vsel %vm462, %v456, %v463
    %vm465 = vcmp.eq.s32.totalorder %v460, 2
    %v466 = vxor.u32 %v456, 2147483648
    %v467 = vsel %vm465, %v466, %v457
    %v468 = vsel %vm461, %v464, %v467
    %v469 = vsel %vm458, nan, %v468
    %v470 = vld [vmem:[%s2] sm:$0xff]
    %v471 = vld [vmem:[%s2 + $0x8] sm:$0xff]
    %v472 = vmul.f32 %v470, %v158
    %v473 = vmul.f32 %v471, %v261
    %476 = vrot.lane.b32.xlu0 %v365, 16
    %v477 = vpop.permute.xlu0 %476
    %478 = vrot.lane.b32.xlu0 %v469, 16
    %v479 = vpop.permute.xlu0 %478
    %v482 = vmul.f32 %v470, %v477
    %v483 = vmul.f32 %v471, %v479
    %486 = vrot.lane.b32.xlu0 %v482, 112
    %v487 = vpop.permute.xlu0 %486
    %488 = vrot.lane.b32.xlu0 %v483, 112
    %v489 = vpop.permute.xlu0 %488
    %v492 = vsub.f32 %v472, %v487
    %v493 = vsub.f32 %v473, %v489
    %496 = vrot.lane.b32.xlu0 %v158, 16
    %v497 = vpop.permute.xlu0 %496
    %498 = vrot.lane.b32.xlu0 %v261, 16
    %v499 = vpop.permute.xlu0 %498
    %v502 = vmul.f32 %v470, %v497
    %v503 = vmul.f32 %v471, %v499
    %v504 = vmul.f32 %v470, %v365
    %v505 = vmul.f32 %v471, %v469
    %508 = vrot.lane.b32.xlu0 %v504, 16
    %v509 = vpop.permute.xlu0 %508
    %510 = vrot.lane.b32.xlu0 %v505, 16
    %v511 = vpop.permute.xlu0 %510
    %v514 = vadd.f32 %v502, %v509
    %v515 = vadd.f32 %v503, %v511
    %516 = vrot.lane.b32.xlu0 %v158, 32
    %v517 = vpop.permute.xlu0 %516
    %518 = vrot.lane.b32.xlu0 %v261, 32
    %v519 = vpop.permute.xlu0 %518
    %v522 = vmul.f32 %v470, %v517
    %v523 = vmul.f32 %v471, %v519
    %524 = vrot.lane.b32.xlu0 %v365, 48
    %v525 = vpop.permute.xlu0 %524
    %526 = vrot.lane.b32.xlu0 %v469, 48
    %v527 = vpop.permute.xlu0 %526
    %v530 = vmul.f32 %v470, %v525
    %v531 = vmul.f32 %v471, %v527
    %534 = vrot.lane.b32.xlu0 %v530, 112
    %v535 = vpop.permute.xlu0 %534
    %536 = vrot.lane.b32.xlu0 %v531, 112
    %v537 = vpop.permute.xlu0 %536
    %v540 = vsub.f32 %v522, %v535
    %v541 = vsub.f32 %v523, %v537
    %542 = vrot.lane.b32.xlu0 %v158, 48
    %v543 = vpop.permute.xlu0 %542
    %544 = vrot.lane.b32.xlu0 %v261, 48
    %v545 = vpop.permute.xlu0 %544
    %v548 = vmul.f32 %v470, %v543
    %v549 = vmul.f32 %v471, %v545
    %550 = vrot.lane.b32.xlu0 %v365, 32
    %v551 = vpop.permute.xlu0 %550
    %552 = vrot.lane.b32.xlu0 %v469, 32
    %v553 = vpop.permute.xlu0 %552
    %v556 = vmul.f32 %v470, %v551
    %v557 = vmul.f32 %v471, %v553
    %560 = vrot.lane.b32.xlu0 %v556, 16
    %v561 = vpop.permute.xlu0 %560
    %562 = vrot.lane.b32.xlu0 %v557, 16
    %v563 = vpop.permute.xlu0 %562
    %v566 = vadd.f32 %v548, %v561
    %v567 = vadd.f32 %v549, %v563
    %568 = vrot.lane.b32.xlu0 %v158, 64
    %v569 = vpop.permute.xlu0 %568
    %570 = vrot.lane.b32.xlu0 %v261, 64
    %v571 = vpop.permute.xlu0 %570
    %v574 = vmul.f32 %v470, %v569
    %v575 = vmul.f32 %v471, %v571
    %576 = vrot.lane.b32.xlu0 %v365, 80
    %v577 = vpop.permute.xlu0 %576
    %578 = vrot.lane.b32.xlu0 %v469, 80
    %v579 = vpop.permute.xlu0 %578
    %v582 = vmul.f32 %v470, %v577
    %v583 = vmul.f32 %v471, %v579
    %586 = vrot.lane.b32.xlu0 %v582, 112
    %v587 = vpop.permute.xlu0 %586
    %588 = vrot.lane.b32.xlu0 %v583, 112
    %v589 = vpop.permute.xlu0 %588
    %v592 = vsub.f32 %v574, %v587
    %v593 = vsub.f32 %v575, %v589
    %594 = vrot.lane.b32.xlu0 %v158, 80
    %v595 = vpop.permute.xlu0 %594
    %596 = vrot.lane.b32.xlu0 %v261, 80
    %v597 = vpop.permute.xlu0 %596
    %v600 = vmul.f32 %v470, %v595
    %v601 = vmul.f32 %v471, %v597
    %602 = vrot.lane.b32.xlu0 %v365, 64
    %v603 = vpop.permute.xlu0 %602
    %604 = vrot.lane.b32.xlu0 %v469, 64
    %v605 = vpop.permute.xlu0 %604
    %v608 = vmul.f32 %v470, %v603
    %v609 = vmul.f32 %v471, %v605
    %612 = vrot.lane.b32.xlu0 %v608, 16
    %v613 = vpop.permute.xlu0 %612
    %614 = vrot.lane.b32.xlu0 %v609, 16
    %v615 = vpop.permute.xlu0 %614
    %v618 = vadd.f32 %v600, %v613
    %v619 = vadd.f32 %v601, %v615
    %620 = vrot.lane.b32.xlu0 %v158, 96
    %v621 = vpop.permute.xlu0 %620
    %622 = vrot.lane.b32.xlu0 %v261, 96
    %v623 = vpop.permute.xlu0 %622
    %v626 = vmul.f32 %v470, %v621
    %v627 = vmul.f32 %v471, %v623
    %628 = vrot.lane.b32.xlu0 %v365, 112
    %v629 = vpop.permute.xlu0 %628
    %630 = vrot.lane.b32.xlu0 %v469, 112
    %v631 = vpop.permute.xlu0 %630
    %v634 = vmul.f32 %v470, %v629
    %v635 = vmul.f32 %v471, %v631
    %638 = vrot.lane.b32.xlu0 %v634, 112
    %v639 = vpop.permute.xlu0 %638
    %640 = vrot.lane.b32.xlu0 %v635, 112
    %v641 = vpop.permute.xlu0 %640
    %v644 = vsub.f32 %v626, %v639
    %v645 = vsub.f32 %v627, %v641
    %646 = vrot.lane.b32.xlu0 %v158, 112
    %v647 = vpop.permute.xlu0 %646
    %648 = vrot.lane.b32.xlu0 %v261, 112
    %v649 = vpop.permute.xlu0 %648
    %v652 = vmul.f32 %v470, %v647
    %v653 = vmul.f32 %v471, %v649
    %654 = vrot.lane.b32.xlu0 %v365, 96
    %v655 = vpop.permute.xlu0 %654
    %656 = vrot.lane.b32.xlu0 %v469, 96
    %v657 = vpop.permute.xlu0 %656
    %v660 = vmul.f32 %v470, %v655
    %v661 = vmul.f32 %v471, %v657
    %664 = vrot.lane.b32.xlu0 %v660, 16
    %v665 = vpop.permute.xlu0 %664
    %666 = vrot.lane.b32.xlu0 %v661, 16
    %v667 = vpop.permute.xlu0 %666
    %v670 = vadd.f32 %v652, %v665
    %v671 = vadd.f32 %v653, %v667
    %vm672 = vcmask 130048
    %v673 = vsel %vm672, %v492, %v514
    %v674 = vsel %vm672, %v493, %v515
    %vm675 = vcmask 261120
    %v676 = vsel %vm675, %v673, %v540
    %v677 = vsel %vm675, %v674, %v541
    %vm678 = vcmask 392192
    %v679 = vsel %vm678, %v676, %v566
    %v680 = vsel %vm678, %v677, %v567
    %vm681 = vcmask 523264
    %v682 = vsel %vm681, %v679, %v592
    %v683 = vsel %vm681, %v680, %v593
    %vm684 = vcmask 654336
    %v685 = vsel %vm684, %v682, %v618
    %v686 = vsel %vm684, %v683, %v619
    %vm687 = vcmask 785408
    %v688 = vsel %vm687, %v685, %v644
    %v689 = vsel %vm687, %v686, %v645
    %vm690 = vcmask 916480
    %v691 = vsel %vm690, %v688, %v670
    %v692 = vsel %vm690, %v689, %v671
    %693 = vst [vmem:[#allocation5] sm:$0xff] %v691
    %694 = vst [vmem:[#allocation5 + $0x8] sm:$0xff] %v692
    %v695 = vld [vmem:[#allocation2] sm:$0xff]
    %v696 = vld [vmem:[#allocation2 + $0x8] sm:$0xff]
    %v697 = vmul.f32 %v695, %v158
    %v698 = vmul.f32 %v696, %v261
    %v699 = vmul.f32 %v695, %v477
    %v700 = vmul.f32 %v696, %v479
    %703 = vrot.lane.b32.xlu0 %v699, 112
    %v704 = vpop.permute.xlu0 %703
    %705 = vrot.lane.b32.xlu0 %v700, 112
    %v706 = vpop.permute.xlu0 %705
    %v709 = vsub.f32 %v697, %v704
    %v710 = vsub.f32 %v698, %v706
    %v711 = vmul.f32 %v695, %v497
    %v712 = vmul.f32 %v696, %v499
    %v713 = vmul.f32 %v695, %v365
    %v714 = vmul.f32 %v696, %v469
    %717 = vrot.lane.b32.xlu0 %v713, 16
    %v718 = vpop.permute.xlu0 %717
    %719 = vrot.lane.b32.xlu0 %v714, 16
    %v720 = vpop.permute.xlu0 %719
    %v723 = vadd.f32 %v711, %v718
    %v724 = vadd.f32 %v712, %v720
    %v725 = vmul.f32 %v695, %v517
    %v726 = vmul.f32 %v696, %v519
    %v727 = vmul.f32 %v695, %v525
    %v728 = vmul.f32 %v696, %v527
    %731 = vrot.lane.b32.xlu0 %v727, 112
    %v732 = vpop.permute.xlu0 %731
    %733 = vrot.lane.b32.xlu0 %v728, 112
    %v734 = vpop.permute.xlu0 %733
    %v737 = vsub.f32 %v725, %v732
    %v738 = vsub.f32 %v726, %v734
    %v739 = vmul.f32 %v695, %v543
    %v740 = vmul.f32 %v696, %v545
    %v741 = vmul.f32 %v695, %v551
    %v742 = vmul.f32 %v696, %v553
    %745 = vrot.lane.b32.xlu0 %v741, 16
    %v746 = vpop.permute.xlu0 %745
    %747 = vrot.lane.b32.xlu0 %v742, 16
    %v748 = vpop.permute.xlu0 %747
    %v751 = vadd.f32 %v739, %v746
    %v752 = vadd.f32 %v740, %v748
    %v753 = vmul.f32 %v695, %v569
    %v754 = vmul.f32 %v696, %v571
    %v755 = vmul.f32 %v695, %v577
    %v756 = vmul.f32 %v696, %v579
    %759 = vrot.lane.b32.xlu0 %v755, 112
    %v760 = vpop.permute.xlu0 %759
    %761 = vrot.lane.b32.xlu0 %v756, 112
    %v762 = vpop.permute.xlu0 %761
    %v765 = vsub.f32 %v753, %v760
    %v766 = vsub.f32 %v754, %v762
    %v767 = vmul.f32 %v695, %v595
    %v768 = vmul.f32 %v696, %v597
    %v769 = vmul.f32 %v695, %v603
    %v770 = vmul.f32 %v696, %v605
    %773 = vrot.lane.b32.xlu0 %v769, 16
    %v774 = vpop.permute.xlu0 %773
    %775 = vrot.lane.b32.xlu0 %v770, 16
    %v776 = vpop.permute.xlu0 %775
    %v779 = vadd.f32 %v767, %v774
    %v780 = vadd.f32 %v768, %v776
    %v781 = vmul.f32 %v695, %v621
    %v782 = vmul.f32 %v696, %v623
    %v783 = vmul.f32 %v695, %v629
    %v784 = vmul.f32 %v696, %v631
    %787 = vrot.lane.b32.xlu0 %v783, 112
    %v788 = vpop.permute.xlu0 %787
    %789 = vrot.lane.b32.xlu0 %v784, 112
    %v790 = vpop.permute.xlu0 %789
    %v793 = vsub.f32 %v781, %v788
    %v794 = vsub.f32 %v782, %v790
    %v795 = vmul.f32 %v695, %v647
    %v796 = vmul.f32 %v696, %v649
    %v797 = vmul.f32 %v695, %v655
    %v798 = vmul.f32 %v696, %v657
    %801 = vrot.lane.b32.xlu0 %v797, 16
    %v802 = vpop.permute.xlu0 %801
    %803 = vrot.lane.b32.xlu0 %v798, 16
    %v804 = vpop.permute.xlu0 %803
    %v807 = vadd.f32 %v795, %v802
    %v808 = vadd.f32 %v796, %v804
    %v809 = vsel %vm672, %v709, %v723
    %v810 = vsel %vm672, %v710, %v724
    %v811 = vsel %vm675, %v809, %v737
    %v812 = vsel %vm675, %v810, %v738
    %v813 = vsel %vm678, %v811, %v751
    %v814 = vsel %vm678, %v812, %v752
    %v815 = vsel %vm681, %v813, %v765
    %v816 = vsel %vm681, %v814, %v766
    %v817 = vsel %vm684, %v815, %v779
    %v818 = vsel %vm684, %v816, %v780
    %v819 = vsel %vm687, %v817, %v793
    %v820 = vsel %vm687, %v818, %v794
    %v821 = vsel %vm690, %v819, %v807
    %v822 = vsel %vm690, %v820, %v808
    %823 = vst [vmem:[#allocation6] sm:$0xff] %v821
    %824 = vst [vmem:[#allocation6 + $0x8] sm:$0xff] %v822
    // Predicated region
    $region22: #{tpu_custom_call.1} parent=1 // pred_check
      _
    $region23: #{tpu_custom_call.1} parent=1 // pred_check_branch
      %826 = sbr.rel (0) target = $region25
    $region24: #{tpu_custom_call.1} parent=1 // pred_region
      %s828 = ssub.s32 256, 256
      %829 = vsyncadd [#allocation4], %s828
      %s830 = sshll.u32 [#allocation5], 4
      %s831 = int_to_ptr.vmem [resolvable:$true] %s830
      %836 = dma.vmem_to_hbm [thread:$0]  %s831, 256, %s4, [#allocation4], 128, 128, 8
    $region25: #{tpu_custom_call.1} parent=1 // pred_fallthru
      _
    // Predicated region
    $region26: #{tpu_custom_call.1} parent=1 // pred_check
      _
    $region27: #{tpu_custom_call.1} parent=1 // pred_check_branch
      %838 = sbr.rel (0) target = $region29
    $region28: #{tpu_custom_call.1} parent=1 // pred_region
      %s840 = ssub.s32 256, 256
      %841 = vsyncadd [#allocation7], %s840
      %s842 = sshll.u32 [#allocation6], 4
      %s843 = int_to_ptr.vmem [resolvable:$true] %s842
      %848 = dma.vmem_to_hbm [thread:$0]  %s843, 256, %s5, [#allocation7], 128, 128, 8
    $region29: #{tpu_custom_call.1} parent=1 // pred_fallthru
      _
    // Predicated region
    $region30: #{tpu_custom_call.1} parent=1 // pred_check
      _
    $region31: #{tpu_custom_call.1} parent=1 // pred_check_branch
      %850 = sbr.rel (0) target = $region33
    $region32: #{tpu_custom_call.1} parent=1 // pred_region
      %851 = dma.done [#allocation4], 256
    $region33: #{tpu_custom_call.1} parent=1 // pred_fallthru
      _
    // Predicated region
    $region34: #{tpu_custom_call.1} parent=1 // pred_check
      _
    $region35: #{tpu_custom_call.1} parent=1 // pred_check_branch
      %853 = sbr.rel (0) target = $region37
    $region36: #{tpu_custom_call.1} parent=1 // pred_region
      %854 = dma.done [#allocation7], 256
    $region37: #{tpu_custom_call.1} parent=1 // pred_fallthru
      _
    %855 = vsyncpa [#allocation3], 1
    %856 = vsyncpa [#allocation4], 1
    %857 = vsyncpa [#allocation7], 1

</llo_original>
